<compile_context>
chip_gen: v7x
topology: tpu7x:2x2x1
jax: 0.10.0
libtpu: 0.0.40
codegen_flags: <defaults>
</compile_context>

<pallas_src>
import functools

import jax
import jax.numpy as jnp
from jax.experimental import pallas as pl
from jax.experimental.pallas import tpu as pltpu


def _round_up(x, m):
    return (x + m - 1) // m * m


def _cdiv(a, b):
    return -(-a // b)


@functools.lru_cache(maxsize=1)
def _default_vmem_budget_bytes():
    """Per-generation scoped-VMEM budget (25% headroom for compiler scratch)."""
    cap = 64 * 1024 * 1024  # conservative fallback == v7x per-core physical VMEM
    try:
        cap = int(pltpu.get_tpu_info().vmem_capacity_bytes)
    except Exception:
        pass
    # ~96 MiB on v5e/v6e (128 MiB physical), ~48 MiB on v7x (64 MiB physical).
    return (cap * 3) // 4


# ---------------------------------------------------------------------------
# Kernels
# ---------------------------------------------------------------------------

def _mlp_kernel_single(x_ref, w1_ref, b1_ref, w2_ref, b2_ref, o_ref):
    """Hidden dim fully resident: fc1 -> ReLU -> fc2 in one shot, no scratch."""
    h = jnp.dot(x_ref[...], w1_ref[...], preferred_element_type=jnp.float32)
    h = jnp.maximum(h + b1_ref[...], 0.0).astype(w2_ref.dtype)
    out = jnp.dot(h, w2_ref[...], preferred_element_type=jnp.float32)
    o_ref[...] = (out + b2_ref[...]).astype(o_ref.dtype)


def _mlp_kernel_chunked(x_ref, w1_ref, b1_ref, w2_ref, b2_ref, o_ref, acc_ref):
    """Hidden dim split over grid axis 1 (reduction); f32 VMEM accumulator."""
    j = pl.program_id(1)

    # fc1 for this hidden chunk (f32 MXU accumulation), ReLU, back to MXU dtype.
    h = jnp.dot(x_ref[...], w1_ref[...], preferred_element_type=jnp.float32)
    h = jnp.maximum(h + b1_ref[...], 0.0).astype(w2_ref.dtype)
    partial = jnp.dot(h, w2_ref[...], preferred_element_type=jnp.float32)

    @pl.when(j == 0)
    def _first():  # direct write: avoids zero-fill + read-modify-write
        acc_ref[...] = partial

    @pl.when(j > 0)
    def _accumulate():
        acc_ref[...] += partial

    @pl.when(j == pl.num_programs(1) - 1)
    def _finalize():
        o_ref[...] = (acc_ref[...] + b2_ref[...]).astype(o_ref.dtype)


# ---------------------------------------------------------------------------
# Wrapper
# ---------------------------------------------------------------------------

@functools.partial(
    jax.jit,
    static_argnames=("tile_m", "max_tile_h", "vmem_budget_bytes", "use_bf16"))
def _mlp_pallas_impl(x, w1_t, b1, w2_t, b2, *, tile_m, max_tile_h,
                     vmem_budget_bytes, use_bf16):
    orig_shape = x.shape
    dim_in = orig_shape[-1]
    dim_hidden = w1_t.shape[1]
    dim_out = w2_t.shape[1]

    out_dtype = x.dtype
    compute_dtype = jnp.bfloat16 if use_bf16 else x.dtype
    c_itemsize = jnp.dtype(compute_dtype).itemsize
    out_itemsize = jnp.dtype(out_dtype).itemsize
    sublane = 8 if c_itemsize >= 4 else (16 if c_itemsize == 2 else 32)

    x2d = x.reshape(-1, dim_in)
    m = x2d.shape[0]

    # Lane-dense (multiple-of-128) padded minor dims: unmasked stores, full
    # MXU contraction occupancy.  Padding contributes exact zeros.
    k_pad = _round_up(dim_in, 128)
    n_pad = _round_up(dim_out, 128)
    h_full = _round_up(dim_hidden, 128)

    # --- Tile selection -----------------------------------------------------
    tm = _round_up(max(sublane, min(tile_m, _round_up(m, sublane))), sublane)
    tile_h = h_full
    if max_tile_h is not None:
        tile_h = min(tile_h, _round_up(max_tile_h, 128))

    def vmem_need(th, tm_):
        # Conservative: count every stream double-buffered.
        w_bytes = 2 * (k_pad * th + th * n_pad) * c_itemsize + 2 * (th + n_pad) * 4
        x_bytes = 2 * tm_ * k_pad * c_itemsize
        o_bytes = 2 * tm_ * n_pad * out_itemsize
        acc_bytes = tm_ * n_pad * 4           # f32 accumulator scratch
        h_bytes = tm_ * th * 4                # fc1 intermediate (f32)
        return w_bytes + x_bytes + o_bytes + acc_bytes + h_bytes

    # Keep the contraction chunk large: shrink tile_h only down to 512 first,
    # then shrink the row tile down to 128, then tile_h the rest of the way.
    while tile_h > 512 and vmem_need(tile_h, tm) > vmem_budget_bytes:
        tile_h = _round_up(max(512, tile_h // 2), 128)
    while tm > 128 and vmem_need(tile_h, tm) > vmem_budget_bytes:
        tm = max(128, _round_up(tm // 2, sublane))
    while tile_h > 128 and vmem_need(tile_h, tm) > vmem_budget_bytes:
        tile_h = _round_up(max(128, tile_h // 2), 128)
    # TODO(synk): for extremely wide dim_in/dim_out this can still exceed the
    # budget; add an N (and/or K) grid axis instead of relying on the limit.

    n_h = _cdiv(h_full, tile_h)
    h_pad = n_h * tile_h

    # v7x has 2 TensorCores sharded over the "parallel" grid axis.  When the
    # hidden dim is un-chunked (weights stay resident, so splitting rows does
    # not re-stream them from HBM), ensure >=2 row tiles for big-enough m.
    if n_h == 1 and m >= 256 and _cdiv(m, tm) < 2:
        tm = max(128, _round_up(_cdiv(m, 2), sublane))

    m_pad = _round_up(m, tm)
    grid = (m_pad // tm, n_h)

    # --- Operand prep (cast + pad; pads are no-ops when already aligned) -----
    # TODO(synk): cache pre-padded / pre-cast weights across calls and handle
    # the m remainder with a masked store instead of padding the activation.
    def pad2(a, rows, cols, dtype):
        a = a.astype(dtype)
        r, c = a.shape
        if r == rows and c == cols:
            return a
        return jnp.pad(a, ((0, rows - r), (0, cols - c)))

    x_p = pad2(x2d, m_pad, k_pad, compute_dtype)
    w1_p = pad2(w1_t, k_pad, h_pad, compute_dtype)
    w2_p = pad2(w2_t, h_pad, n_pad, compute_dtype)
    b1_p = pad2(b1.reshape(1, -1), 1, h_pad, jnp.float32)   # biases stay f32
    b2_p = pad2(b2.reshape(1, -1), 1, n_pad, jnp.float32)

    single = (n_h == 1)

    def spec(shape, index_map, constant_index):
        if constant_index:
            # Block index never changes over the grid -> single-buffer (VMEM).
            return pl.BlockSpec(shape, index_map, pipeline_mode=pl.Buffered(1))
        return pl.BlockSpec(shape, index_map)

    in_specs = [
        pl.BlockSpec((tm, k_pad), lambda i, j: (i, 0)),       # x rows
        spec((k_pad, tile_h), lambda i, j: (0, j), single),   # W1 (in, hid) chunk
        spec((1, tile_h), lambda i, j: (0, j), single),       # b1 chunk
        spec((tile_h, n_pad), lambda i, j: (j, 0), single),   # W2 (hid, out) chunk
        spec((1, n_pad), lambda i, j: (0, 0), True),          # b2 (always constant)
    ]
    out_spec = pl.BlockSpec((tm, n_pad), lambda i, j: (i, 0))

    kernel = _mlp_kernel_single if single else _mlp_kernel_chunked
    scratch = [] if single else [pltpu.VMEM((tm, n_pad), jnp.float32)]

    flops = 2 * m * dim_in * dim_hidden + 2 * m * dim_hidden * dim_out
    bytes_accessed = ((m * dim_in + dim_in * dim_hidden
                       + dim_hidden * dim_out) * c_itemsize
                      + m * dim_out * out_itemsize
                      + (dim_hidden + dim_out) * 4)
    cost = pl.CostEstimate(flops=flops, transcendentals=0,
                           bytes_accessed=bytes_accessed)

    out = pl.pallas_call(
        kernel,
        out_shape=jax.ShapeDtypeStruct((m_pad, n_pad), out_dtype),
        grid_spec=pltpu.PrefetchScalarGridSpec(
            num_scalar_prefetch=0,
            grid=grid,
            in_specs=in_specs,
            out_specs=out_spec,
            scratch_shapes=scratch,
        ),
        compiler_params=pltpu.CompilerParams(
            dimension_semantics=("parallel", "arbitrary"),
            # Budget + headroom; stays under physical VMEM (budget = 0.75*cap).
            vmem_limit_bytes=int(vmem_budget_bytes + vmem_budget_bytes // 4)),
        cost_estimate=cost,
    )(x_p, w1_p, b1_p, w2_p, b2_p)

    out = out[:m, :dim_out]
    return out.reshape(*orig_shape[:-1], dim_out)


def mlp_pallas(x, w1_t, b1, w2_t, b2, *, tile_m=None, max_tile_h=None,
               vmem_budget_bytes=None, use_bf16=True):
    """Fused MLP forward.

    x: (..., dim_in); w1_t: (dim_in, dim_hidden); b1: (dim_hidden,);
    w2_t: (dim_hidden, dim_out); b2: (dim_out,).
    (PyTorch nn.Linear stores weight as (out, in); pass its transpose.)
    """
    if vmem_budget_bytes is None:
        vmem_budget_bytes = _default_vmem_budget_bytes()
    if tile_m is None:
        tile_m = 512 if use_bf16 else 256
    return _mlp_pallas_impl(
        x, w1_t, b1, w2_t, b2,
        tile_m=int(tile_m),
        max_tile_h=None if max_tile_h is None else int(max_tile_h),
        vmem_budget_bytes=int(vmem_budget_bytes),
        use_bf16=bool(use_bf16))


def mlp_reference(x, w1_t, b1, w2_t, b2):
    h = jnp.maximum(x @ w1_t + b1, 0.0)
    return h @ w2_t + b2


if __name__ == "__main__":
    # Module config: dim_in=32, hidden_ratio=4.0 -> dim_hidden=128, dim_out=32.
    batch, seq, dim_in = 2, 8, 32
    hidden_ratio = 4.0
    dim_hidden = int(dim_in * hidden_ratio)
    dim_out = dim_in

    key = jax.random.PRNGKey(0)
    kx, kw1, kb1, kw2, kb2 = jax.random.split(key, 5)

    x = jax.random.normal(kx, (batch, seq, dim_in), dtype=jnp.float32)
    w1_t = jax.random.normal(kw1, (dim_in, dim_hidden), dtype=jnp.float32) * 0.05
    b1 = jax.random.normal(kb1, (dim_hidden,), dtype=jnp.float32) * 0.05
    w2_t = jax.random.normal(kw2, (dim_hidden, dim_out), dtype=jnp.float32) * 0.05
    b2 = jax.random.normal(kb2, (dim_out,), dtype=jnp.float32) * 0.05

    ref = mlp_reference(x, w1_t, b1, w2_t, b2)

    # 1) f32 compute path.
    out_f32 = jax.block_until_ready(
        mlp_pallas(x, w1_t, b1, w2_t, b2, use_bf16=False))
    assert out_f32.shape == (batch, seq, dim_out)
    assert jnp.allclose(out_f32, ref, atol=1e-2, rtol=1e-2), "f32 path mismatch"

    # 2) Default bf16 MXU path (f32 accumulation bounds the error).
    out_bf16 = jax.block_until_ready(mlp_pallas(x, w1_t, b1, w2_t, b2))
    assert out_bf16.shape == (batch, seq, dim_out)
    assert jnp.allclose(out_bf16, ref, atol=3e-2, rtol=3e-2), "bf16 path mismatch"

    # 3) Hidden-dim reduction path (force chunking) with non-128-aligned dims.
    d_in2, d_hid2, d_out2 = 64, 256, 96
    k2 = jax.random.split(key, 6)
    x2 = jax.random.normal(k2[0], (batch, seq, d_in2), dtype=jnp.float32)
    w1b = jax.random.normal(k2[1], (d_in2, d_hid2), dtype=jnp.float32) * 0.05
    b1b = jax.random.normal(k2[2], (d_hid2,), dtype=jnp.float32) * 0.05
    w2b = jax.random.normal(k2[3], (d_hid2, d_out2), dtype=jnp.float32) * 0.05
    b2b = jax.random.normal(k2[4], (d_out2,), dtype=jnp.float32) * 0.05
    ref2 = mlp_reference(x2, w1b, b1b, w2b, b2b)
    out2 = jax.block_until_ready(
        mlp_pallas(x2, w1b, b1b, w2b, b2b, use_bf16=False, max_tile_h=128))
    assert out2.shape == (batch, seq, d_out2)
    assert jnp.allclose(out2, ref2, atol=1e-2, rtol=1e-2), "chunked path mismatch"

    print("KERNEL_OK")
</pallas_src>

<mosaic_0001>
module attributes {stable_mosaic.version = 11 : i64} {
  func.func @_mlp_kernel_single(%arg0: i32, %arg1: i32, %arg2: memref<16x128xf32, #tpu.memory_space<vmem>>, %arg3: memref<128x128xf32, #tpu.memory_space<vmem>>, %arg4: memref<1x128xf32, #tpu.memory_space<vmem>>, %arg5: memref<128x128xf32, #tpu.memory_space<vmem>>, %arg6: memref<1x128xf32, #tpu.memory_space<vmem>>, %arg7: memref<16x128xf32, #tpu.memory_space<vmem>>) attributes {dimension_semantics = [#tpu.dimension_semantics<parallel>, #tpu.dimension_semantics<arbitrary>], iteration_bounds = array<i64: 1, 1>, scalar_prefetch = 0 : i64, scratch_operands = 0 : i64, tpu.core_type = #tpu.core_type<tc>, window_params = [{transform_indices = @transform_0, window_bounds = array<i64: 16, 128>}, {pipeline_mode = #tpu.pipeline_mode<synchronous>, transform_indices = @transform_1, window_bounds = array<i64: 128, 128>}, {pipeline_mode = #tpu.pipeline_mode<synchronous>, transform_indices = @transform_2, window_bounds = array<i64: 1, 128>}, {pipeline_mode = #tpu.pipeline_mode<synchronous>, transform_indices = @transform_3, window_bounds = array<i64: 128, 128>}, {pipeline_mode = #tpu.pipeline_mode<synchronous>, transform_indices = @transform_4, window_bounds = array<i64: 1, 128>}, {transform_indices = @transform_5, window_bounds = array<i64: 16, 128>}]} {
    %c0 = arith.constant 0 : index
    %c0_0 = arith.constant 0 : index
    %0 = vector.load %arg2[%c0, %c0_0] : memref<16x128xf32, #tpu.memory_space<vmem>>, vector<16x128xf32>
    %c0_1 = arith.constant 0 : index
    %c0_2 = arith.constant 0 : index
    %1 = vector.load %arg3[%c0_1, %c0_2] : memref<128x128xf32, #tpu.memory_space<vmem>>, vector<128x128xf32>
    %cst = arith.constant dense<0.000000e+00> : vector<16x128xf32>
    %2 = tpu.matmul %0, %1, %cst {dimension_numbers = #tpu.dot_dimension_numbers<[1], [0], [0], [1], [0, 0, 1, 1], [], []>} : vector<16x128xf32>, vector<128x128xf32>, vector<16x128xf32> -> vector<16x128xf32>
    %c0_3 = arith.constant 0 : index
    %c0_4 = arith.constant 0 : index
    %3 = vector.load %arg4[%c0_3, %c0_4] : memref<1x128xf32, #tpu.memory_space<vmem>>, vector<1x128xf32>
    %4 = vector.broadcast %3 : vector<1x128xf32> to vector<16x128xf32>
    %5 = arith.addf %2, %4 : vector<16x128xf32>
    %cst_5 = arith.constant 0.000000e+00 : f32
    %6 = vector.broadcast %cst_5 : f32 to vector<16x128xf32>
    %7 = arith.maximumf %5, %6 : vector<16x128xf32>
    %c0_6 = arith.constant 0 : index
    %c0_7 = arith.constant 0 : index
    %8 = vector.load %arg5[%c0_6, %c0_7] : memref<128x128xf32, #tpu.memory_space<vmem>>, vector<128x128xf32>
    %cst_8 = arith.constant dense<0.000000e+00> : vector<16x128xf32>
    %9 = tpu.matmul %7, %8, %cst_8 {dimension_numbers = #tpu.dot_dimension_numbers<[1], [0], [0], [1], [0, 0, 1, 1], [], []>} : vector<16x128xf32>, vector<128x128xf32>, vector<16x128xf32> -> vector<16x128xf32>
    %c0_9 = arith.constant 0 : index
    %c0_10 = arith.constant 0 : index
    %10 = vector.load %arg6[%c0_9, %c0_10] : memref<1x128xf32, #tpu.memory_space<vmem>>, vector<1x128xf32>
    %11 = vector.broadcast %10 : vector<1x128xf32> to vector<16x128xf32>
    %12 = arith.addf %9, %11 : vector<16x128xf32>
    %c0_11 = arith.constant 0 : index
    %c0_12 = arith.constant 0 : index
    %13 = vector.load %arg7[%c0_11, %c0_12] : memref<16x128xf32, #tpu.memory_space<vmem>>, vector<16x128xf32>
    tpu.vector_store %arg7[%c0_11, %c0_12], %12 {strides = array<i32>} : memref<16x128xf32, #tpu.memory_space<vmem>>, vector<16x128xf32>,
    return
  }
  func.func @transform_0(%arg0: i32, %arg1: i32) -> (i32, i32) {
    %c0_i32 = arith.constant 0 : i32
    %c0_i32_0 = arith.constant 0 : i32
    return %arg0, %c0_i32 : i32, i32
  }
  func.func @transform_1(%arg0: i32, %arg1: i32) -> (i32, i32) {
    %c0_i32 = arith.constant 0 : i32
    %c0_i32_0 = arith.constant 0 : i32
    return %c0_i32, %arg1 : i32, i32
  }
  func.func @transform_2(%arg0: i32, %arg1: i32) -> (i32, i32) {
    %c0_i32 = arith.constant 0 : i32
    %c0_i32_0 = arith.constant 0 : i32
    return %c0_i32, %arg1 : i32, i32
  }
  func.func @transform_3(%arg0: i32, %arg1: i32) -> (i32, i32) {
    %c0_i32 = arith.constant 0 : i32
    %c0_i32_0 = arith.constant 0 : i32
    return %arg1, %c0_i32 : i32, i32
  }
  func.func @transform_4(%arg0: i32, %arg1: i32) -> (i32, i32) {
    %c0_i32 = arith.constant 0 : i32
    %c0_i32_0 = arith.constant 0 : i32
    %c0_i32_1 = arith.constant 0 : i32
    return %c0_i32, %c0_i32_0 : i32, i32
  }
  func.func @transform_5(%arg0: i32, %arg1: i32) -> (i32, i32) {
    %c0_i32 = arith.constant 0 : i32
    %c0_i32_0 = arith.constant 0 : i32
    return %arg0, %c0_i32 : i32, i32
  }
}

</mosaic_0001>

<llo_original>
// kernel: _mlp_pallas_impl.1
$region0: #{_mlp_pallas_impl.1}
  #allocation0 [shape = 'u32[]', space=smem, size = 0x4, offset = 0x4, fixed_abs, tag = 'smem constant byte address 0x4 - core index']
  #allocation1 [shape = 'u32[144,128]{1,0:T(1,128)}', space=vmem, size = 0x12000, scoped, tag = 'internal scratch']
  %s0 = inlined_call_operand.vmem [shape: f32[16,128], index: 0, kind: input, shape index: {}]
  %s1 = inlined_call_operand.vmem [shape: f32[128,128], index: 1, kind: input, shape index: {}]
  %s2 = inlined_call_operand.vmem [shape: f32[1,128], index: 2, kind: input, shape index: {}]
  %s3 = inlined_call_operand.vmem [shape: f32[128,128], index: 3, kind: input, shape index: {}]
  %s4 = inlined_call_operand.vmem [shape: f32[1,128], index: 4, kind: input, shape index: {}]
  %s5 = inlined_call_operand.vmem [shape: f32[16,128], index: 5, kind: output, shape index: {}]
  %s6 = sld [smem:[#allocation0]]
  $region30: #{_mlp_pallas_impl.1} parent=0
    _
  %s8 = ssub.s32 1, %s6
  %s9 = scalar_select 0, %s8, %s6
  // Predicated region
  $region2: #{_mlp_pallas_impl.1} parent=0 // pred_check
    _
  $region3: #{_mlp_pallas_impl.1} parent=0 // pred_check_branch
    %11 = sbr.rel (0) target = $region5
  $region4: #{_mlp_pallas_impl.1} parent=0 // pred_region
    _
  $region5: #{_mlp_pallas_impl.1} parent=0 // pred_fallthru
    _
  // Predicated region
  $region6: #{_mlp_pallas_impl.1} parent=0 // pred_check
    _
  $region7: #{_mlp_pallas_impl.1} parent=0 // pred_check_branch
    %13 = sbr.rel (0) target = $region9
  $region8: #{_mlp_pallas_impl.1} parent=0 // pred_region
    _
  $region9: #{_mlp_pallas_impl.1} parent=0 // pred_fallthru
    _
  // Predicated region
  $region10: #{_mlp_pallas_impl.1} parent=0 // pred_check
    _
  $region11: #{_mlp_pallas_impl.1} parent=0 // pred_check_branch
    %15 = sbr.rel (0) target = $region13
  $region12: #{_mlp_pallas_impl.1} parent=0 // pred_region
    _
  $region13: #{_mlp_pallas_impl.1} parent=0 // pred_fallthru
    _
  // Predicated region
  $region14: #{_mlp_pallas_impl.1} parent=0 // pred_check
    _
  $region15: #{_mlp_pallas_impl.1} parent=0 // pred_check_branch
    %17 = sbr.rel (0) target = $region17
  $region16: #{_mlp_pallas_impl.1} parent=0 // pred_region
    _
  $region17: #{_mlp_pallas_impl.1} parent=0 // pred_fallthru
    _
  // Predicated region
  $region18: #{_mlp_pallas_impl.1} parent=0 // pred_check
    _
  $region19: #{_mlp_pallas_impl.1} parent=0 // pred_check_branch
    %19 = sbr.rel (0) target = $region21
  $region20: #{_mlp_pallas_impl.1} parent=0 // pred_region
    _
  $region21: #{_mlp_pallas_impl.1} parent=0 // pred_fallthru
    _
  %v20 = vld [vmem:[%s0] sm:$0xff]
  %v21 = vld [vmem:[%s0 + $0x8] sm:$0xff]
  %v22 = vld [vmem:[%s1] sm:$0xff]
  %v23 = vld [vmem:[%s1 + $0x8] sm:$0xff]
  %v24 = vld [vmem:[%s1 + $0x10] sm:$0xff]
  %v25 = vld [vmem:[%s1 + $0x18] sm:$0xff]
  %v26 = vld [vmem:[%s1 + $0x20] sm:$0xff]
  %v27 = vld [vmem:[%s1 + $0x28] sm:$0xff]
  %v28 = vld [vmem:[%s1 + $0x30] sm:$0xff]
  %v29 = vld [vmem:[%s1 + $0x38] sm:$0xff]
  %v30 = vld [vmem:[%s1 + $0x40] sm:$0xff]
  %v31 = vld [vmem:[%s1 + $0x48] sm:$0xff]
  %v32 = vld [vmem:[%s1 + $0x50] sm:$0xff]
  %v33 = vld [vmem:[%s1 + $0x58] sm:$0xff]
  %v34 = vld [vmem:[%s1 + $0x60] sm:$0xff]
  %v35 = vld [vmem:[%s1 + $0x68] sm:$0xff]
  %v36 = vld [vmem:[%s1 + $0x70] sm:$0xff]
  %v37 = vld [vmem:[%s1 + $0x78] sm:$0xff]
  %v38 = vld [vmem:[%s2] sm:$0x1]
  %v40 = vlaneseq
  %v41 = vshrl.u32 %v40, 7
  %v42 = vsub.s32 0, %v41
  %v43 = vrot.slane %v38, %v42
  %45 = vmatprep.subr.mxu0 0.0
  %46 = vmatpush1.msra.mxu0 %v22
  %47 = vmatprep.subr.mxu0 0.0
  %48 = vmatpush1.msra.mxu0 %v23
  %49 = vmatprep.subr.mxu0 0.0
  %50 = vmatpush1.msra.mxu0 %v24
  %51 = vmatprep.subr.mxu0 0.0
  %52 = vmatpush1.msra.mxu0 %v25
  %53 = vmatprep.subr.mxu0 0.0
  %54 = vmatpush1.msra.mxu0 %v26
  %55 = vmatprep.subr.mxu0 0.0
  %56 = vmatpush1.msra.mxu0 %v27
  %57 = vmatprep.subr.mxu0 0.0
  %58 = vmatpush1.msra.mxu0 %v28
  %59 = vmatprep.subr.mxu0 0.0
  %60 = vmatpush1.msra.mxu0 %v29
  %61 = vmatprep.subr.mxu0 0.0
  %62 = vmatpush1.msra.mxu0 %v30
  %63 = vmatprep.subr.mxu0 0.0
  %64 = vmatpush1.msra.mxu0 %v31
  %65 = vmatprep.subr.mxu0 0.0
  %66 = vmatpush1.msra.mxu0 %v32
  %67 = vmatprep.subr.mxu0 0.0
  %68 = vmatpush1.msra.mxu0 %v33
  %69 = vmatprep.subr.mxu0 0.0
  %70 = vmatpush1.msra.mxu0 %v34
  %71 = vmatprep.subr.mxu0 0.0
  %72 = vmatpush1.msra.mxu0 %v35
  %73 = vmatprep.subr.mxu0 0.0
  %74 = vmatpush1.msra.mxu0 %v36
  %75 = vmatprep.subr.mxu0 0.0
  %76 = vmatpush1.msra.mxu0 %v37
  %77 = vmatprep.subr.mxu0 0.0
  %78 = vmatpush1.msra.mxu0 0.0
  %79 = vmatprep.subr.mxu0 0.0
  %80 = vmatpush1.msra.mxu0 0.0
  %81 = vmatprep.subr.mxu0 0.0
  %82 = vmatpush1.msra.mxu0 0.0
  %83 = vmatprep.subr.mxu0 0.0
  %84 = vmatpush1.msra.mxu0 0.0
  %85 = vmatprep.subr.mxu0 0.0
  %86 = vmatpush1.msra.mxu0 0.0
  %87 = vmatprep.subr.mxu0 0.0
  %88 = vmatpush1.msra.mxu0 0.0
  %89 = vmatprep.subr.mxu0 0.0
  %90 = vmatpush1.msra.mxu0 0.0
  %91 = vmatprep.subr.mxu0 0.0
  %92 = vmatpush1.msra.mxu0 0.0
  %93 = vmatprep.subr.mxu0 0.0
  %94 = vmatpush1.msra.mxu0 0.0
  %95 = vmatprep.subr.mxu0 0.0
  %96 = vmatpush1.msra.mxu0 0.0
  %97 = vmatprep.subr.mxu0 0.0
  %98 = vmatpush1.msra.mxu0 0.0
  %99 = vmatprep.subr.mxu0 0.0
  %100 = vmatpush1.msra.mxu0 0.0
  %101 = vmatprep.subr.mxu0 0.0
  %102 = vmatpush1.msra.mxu0 0.0
  %103 = vmatprep.subr.mxu0 0.0
  %104 = vmatpush1.msra.mxu0 0.0
  %105 = vmatprep.subr.mxu0 0.0
  %106 = vmatpush1.msra.mxu0 0.0
  %107 = vmatprep.subr.mxu0 0.0
  %108 = vmatpush1.msra.mxu0 0.0
  %109 = vmatprep.mubr.f32.mxu0 0.0
  %110 = vmatmul.mubr.f32.gmra.mrb[0].mxu0 %v20
  %v111 = vpop.f32.mrb[0].mxu0
  %v112 = vadd.f32 %v43, %v111
  %v113 = vpop.f32.mrb[0].mxu0
  %114 = vmatprep.mubr.f32.mxu0 0.0
  %115 = vmatmul.mubr.f32.gmra.mrb[0].mxu0 %v21
  %v116 = vpop.f32.mrb[0].mxu0
  %v117 = vadd.f32 %v43, %v116
  %v118 = vpop.f32.mrb[0].mxu0
  %119 = vdwg.mxu0
  %v120 = vmax.f32 %v112, 0.0
  %v121 = vmax.f32 %v117, 0.0
  %v122 = vld [vmem:[%s3] sm:$0xff]
  %v123 = vld [vmem:[%s3 + $0x8] sm:$0xff]
  %v124 = vld [vmem:[%s3 + $0x10] sm:$0xff]
  %v125 = vld [vmem:[%s3 + $0x18] sm:$0xff]
  %v126 = vld [vmem:[%s3 + $0x20] sm:$0xff]
  %v127 = vld [vmem:[%s3 + $0x28] sm:$0xff]
  %v128 = vld [vmem:[%s3 + $0x30] sm:$0xff]
  %v129 = vld [vmem:[%s3 + $0x38] sm:$0xff]
  %v130 = vld [vmem:[%s3 + $0x40] sm:$0xff]
  %v131 = vld [vmem:[%s3 + $0x48] sm:$0xff]
  %v132 = vld [vmem:[%s3 + $0x50] sm:$0xff]
  %v133 = vld [vmem:[%s3 + $0x58] sm:$0xff]
  %v134 = vld [vmem:[%s3 + $0x60] sm:$0xff]
  %v135 = vld [vmem:[%s3 + $0x68] sm:$0xff]
  %v136 = vld [vmem:[%s3 + $0x70] sm:$0xff]
  %v137 = vld [vmem:[%s3 + $0x78] sm:$0xff]
  %v138 = vld [vmem:[%s4] sm:$0x1]
  %v140 = vlaneseq
  %v141 = vshrl.u32 %v140, 7
  %v142 = vsub.s32 0, %v141
  %v143 = vrot.slane %v138, %v142
  %145 = vmatprep.subr.mxu0 0.0
  %146 = vmatpush1.msra.mxu0 %v122
  %147 = vmatprep.subr.mxu0 0.0
  %148 = vmatpush1.msra.mxu0 %v123
  %149 = vmatprep.subr.mxu0 0.0
  %150 = vmatpush1.msra.mxu0 %v124
  %151 = vmatprep.subr.mxu0 0.0
  %152 = vmatpush1.msra.mxu0 %v125
  %153 = vmatprep.subr.mxu0 0.0
  %154 = vmatpush1.msra.mxu0 %v126
  %155 = vmatprep.subr.mxu0 0.0
  %156 = vmatpush1.msra.mxu0 %v127
  %157 = vmatprep.subr.mxu0 0.0
  %158 = vmatpush1.msra.mxu0 %v128
  %159 = vmatprep.subr.mxu0 0.0
  %160 = vmatpush1.msra.mxu0 %v129
  %161 = vmatprep.subr.mxu0 0.0
  %162 = vmatpush1.msra.mxu0 %v130
  %163 = vmatprep.subr.mxu0 0.0
  %164 = vmatpush1.msra.mxu0 %v131
  %165 = vmatprep.subr.mxu0 0.0
  %166 = vmatpush1.msra.mxu0 %v132
  %167 = vmatprep.subr.mxu0 0.0
  %168 = vmatpush1.msra.mxu0 %v133
  %169 = vmatprep.subr.mxu0 0.0
  %170 = vmatpush1.msra.mxu0 %v134
  %171 = vmatprep.subr.mxu0 0.0
  %172 = vmatpush1.msra.mxu0 %v135
  %173 = vmatprep.subr.mxu0 0.0
  %174 = vmatpush1.msra.mxu0 %v136
  %175 = vmatprep.subr.mxu0 0.0
  %176 = vmatpush1.msra.mxu0 %v137
  %177 = vmatprep.subr.mxu0 0.0
  %178 = vmatpush1.msra.mxu0 0.0
  %179 = vmatprep.subr.mxu0 0.0
  %180 = vmatpush1.msra.mxu0 0.0
  %181 = vmatprep.subr.mxu0 0.0
  %182 = vmatpush1.msra.mxu0 0.0
  %183 = vmatprep.subr.mxu0 0.0
  %184 = vmatpush1.msra.mxu0 0.0
  %185 = vmatprep.subr.mxu0 0.0
  %186 = vmatpush1.msra.mxu0 0.0
  %187 = vmatprep.subr.mxu0 0.0
  %188 = vmatpush1.msra.mxu0 0.0
  %189 = vmatprep.subr.mxu0 0.0
  %190 = vmatpush1.msra.mxu0 0.0
  %191 = vmatprep.subr.mxu0 0.0
  %192 = vmatpush1.msra.mxu0 0.0
  %193 = vmatprep.subr.mxu0 0.0
  %194 = vmatpush1.msra.mxu0 0.0
  %195 = vmatprep.subr.mxu0 0.0
  %196 = vmatpush1.msra.mxu0 0.0
  %197 = vmatprep.subr.mxu0 0.0
  %198 = vmatpush1.msra.mxu0 0.0
  %199 = vmatprep.subr.mxu0 0.0
  %200 = vmatpush1.msra.mxu0 0.0
  %201 = vmatprep.subr.mxu0 0.0
  %202 = vmatpush1.msra.mxu0 0.0
  %203 = vmatprep.subr.mxu0 0.0
  %204 = vmatpush1.msra.mxu0 0.0
  %205 = vmatprep.subr.mxu0 0.0
  %206 = vmatpush1.msra.mxu0 0.0
  %207 = vmatprep.subr.mxu0 0.0
  %208 = vmatpush1.msra.mxu0 0.0
  %209 = vmatprep.mubr.f32.mxu0 0.0
  %210 = vmatmul.mubr.f32.gmra.mrb[0].mxu0 %v120
  %v211 = vpop.f32.mrb[0].mxu0
  %v212 = vadd.f32 %v143, %v211
  %v213 = vpop.f32.mrb[0].mxu0
  %214 = vmatprep.mubr.f32.mxu0 0.0
  %215 = vmatmul.mubr.f32.gmra.mrb[0].mxu0 %v121
  %v216 = vpop.f32.mrb[0].mxu0
  %v217 = vadd.f32 %v143, %v216
  %v218 = vpop.f32.mrb[0].mxu0
  %219 = vdwg.mxu0
  %220 = vst [vmem:[%s5] sm:$0xff] %v212
  %221 = vst [vmem:[%s5 + $0x8] sm:$0xff] %v217
  // Predicated region
  $region22: #{_mlp_pallas_impl.1} parent=0 // pred_check
    _
  $region23: #{_mlp_pallas_impl.1} parent=0 // pred_check_branch
    %223 = sbr.rel (0) target = $region25
  $region24: #{_mlp_pallas_impl.1} parent=0 // pred_region
    _
  $region25: #{_mlp_pallas_impl.1} parent=0 // pred_fallthru
    _
  // Predicated region
  $region26: #{_mlp_pallas_impl.1} parent=0 // pred_check
    _
  $region27: #{_mlp_pallas_impl.1} parent=0 // pred_check_branch
    %225 = sbr.rel (0) target = $region29
  $region28: #{_mlp_pallas_impl.1} parent=0 // pred_region
    _
  $region29: #{_mlp_pallas_impl.1} parent=0 // pred_fallthru
    _

</llo_original>
